<compile_context>
chip_gen: v5e
topology: v5e:2x2
jax: 0.10.0
libtpu: 0.0.40
codegen_flags: <defaults>
</compile_context>

<pallas_src>
import math

import jax
import jax.numpy as jnp
import numpy as np
from jax.experimental import pallas as pl
from jax.experimental.pallas import tpu as pltpu


# -----------------------------------------------------------------------------
# Kernels.  Grid = (M_tiles, F_tiles); F (hidden dim) is the reduction axis.
# -----------------------------------------------------------------------------
def _ffn_kernel_direct(x_ref, w1_ref, b1_ref, w2_ref, b2_ref, o_ref):
    """Output dtype is f32: accumulate directly into the resident output block."""
    f = pl.program_id(1)

    @pl.when(f == 0)
    def _init():
        o_ref[...] = jnp.zeros_like(o_ref)

    # linear1 slice + ReLU (dropout == identity in eval mode)
    h = jnp.dot(x_ref[...], w1_ref[...], preferred_element_type=jnp.float32)
    h = jnp.maximum(h + b1_ref[...], 0.0)
    # TODO(synk): stochastic dropout (train mode) not implemented.

    # Partial contribution of this d_ff slice to linear2 output.
    o_ref[...] += jnp.dot(h.astype(w2_ref.dtype), w2_ref[...],
                          preferred_element_type=jnp.float32)

    @pl.when(f == pl.num_programs(1) - 1)
    def _finalize():
        o_ref[...] += b2_ref[...]


def _ffn_kernel_acc(x_ref, w1_ref, b1_ref, w2_ref, b2_ref, o_ref, acc_ref):
    """Narrow output dtype (e.g. bf16): accumulate in an f32 scratch, cast once."""
    f = pl.program_id(1)

    @pl.when(f == 0)
    def _init():
        acc_ref[...] = jnp.zeros_like(acc_ref)

    h = jnp.dot(x_ref[...], w1_ref[...], preferred_element_type=jnp.float32)
    h = jnp.maximum(h + b1_ref[...], 0.0)
    # TODO(synk): stochastic dropout (train mode) not implemented.

    acc_ref[...] += jnp.dot(h.astype(w2_ref.dtype), w2_ref[...],
                            preferred_element_type=jnp.float32)

    @pl.when(f == pl.num_programs(1) - 1)
    def _finalize():
        o_ref[...] = (acc_ref[...] + b2_ref[...]).astype(o_ref.dtype)


# -----------------------------------------------------------------------------
# Wrapper.
# -----------------------------------------------------------------------------
def _round_up(x, m):
    return (x + m - 1) // m * m


def feed_forward_pallas(x, w1, b1, w2, b2, *, block_m=512, block_f=512,
                        compute_dtype=jnp.bfloat16):
    """FeedForward forward pass.  w1: (D, F), w2: (F, D) — "in, out" layout."""
    D, F = w1.shape
    assert x.shape[-1] == D and w2.shape == (F, D)

    out_dtype = x.dtype
    orig_leading = x.shape[:-1]
    x2d = x.reshape(-1, D)
    M = x2d.shape[0]

    if compute_dtype is not None:
        x2d = x2d.astype(compute_dtype)
        w1 = w1.astype(compute_dtype)
        w2 = w2.astype(compute_dtype)
    cd_bytes = jnp.dtype(x2d.dtype).itemsize
    out_bytes = jnp.dtype(out_dtype).itemsize
    f32_out = (out_dtype == jnp.float32)

    # ---- VMEM budget (per generation) ---------------------------------------
    try:
        vmem_cap = int(pltpu.get_tpu_info().vmem_capacity_bytes)
    except Exception:
        vmem_cap = 64 * 1024 * 1024  # conservative: v7x per-TC size
    vmem_limit = min(int(vmem_cap * 0.75), 100 * 1024 * 1024)

    # ---- Row tile (bm): amortizes each W1/W2 stream over bm output rows ------
    if M <= block_m:
        bm = _round_up(M, 8)
    else:
        bm = block_m
        for cand in (block_m, 384, 256, 128):   # prefer a tile that divides M
            if cand <= block_m and M % cand == 0:
                bm = cand
                break
    if M >= 256:
        # Ensure >= 2 M-tiles so the "parallel" axis splits across v7x's 2 TCs.
        bm = min(bm, _round_up(pl.cdiv(M, 2), 8))

    # ---- Hidden (reduction) tile bf ------------------------------------------
    resident_weight_bytes = 2 * D * F * cd_bytes          # W1 + W2
    if F % 128 != 0:
        bf = F                                            # irregular F: one block
    elif 2 * resident_weight_bytes <= vmem_limit // 2:
        bf = F                                            # full weight residency
    else:
        bf = 128
        for cand in (min(block_f, F), 512, 256, 128):
            if 0 < cand <= F and F % cand == 0:
                bf = cand
                break

    # ---- Fit double-buffered tiles into the VMEM budget ----------------------
    def _tile_bytes(bm_, bf_):
        xb = 2 * bm_ * D * cd_bytes
        wb = 2 * (D * bf_ + bf_ * D) * cd_bytes
        ob = 2 * bm_ * D * out_bytes
        acc = 0 if f32_out else bm_ * D * 4
        bias = 2 * (bf_ + D) * 4
        return xb + wb + ob + acc + bias

    while _tile_bytes(bm, bf) > vmem_limit and bf % 256 == 0:
        bf //= 2                                           # shrink bf before bm
    while _tile_bytes(bm, bf) > vmem_limit and bm > 128 and bm % 16 == 0:
        bm //= 2

    # ---- Row padding only if unavoidable --------------------------------------
    Mp = _round_up(M, bm)
    pad_m = Mp - M
    if pad_m:
        x2d = jnp.pad(x2d, ((0, pad_m), (0, 0)))

    b1 = b1.reshape(1, F).astype(jnp.float32)
    b2 = b2.reshape(1, D).astype(jnp.float32)

    m_tiles, f_tiles = Mp // bm, F // bf
    grid = (m_tiles, f_tiles)

    # ---- Advisory cost estimate (includes weight re-streaming) ---------------
    weight_streams = 1 if f_tiles == 1 else m_tiles
    flops = 4 * Mp * D * F                                  # two matmuls
    bytes_accessed = int(
        Mp * D * cd_bytes                                   # x read
        + weight_streams * 2 * D * F * cd_bytes             # W1 + W2 streams
        + (F + D) * 4                                       # biases
        + Mp * D * out_bytes)                               # output writeback
    cost = pl.CostEstimate(flops=flops, transcendentals=0,
                           bytes_accessed=bytes_accessed)

    kernel = _ffn_kernel_direct if f32_out else _ffn_kernel_acc
    scratch = [] if f32_out else [pltpu.VMEM((bm, D), jnp.float32)]

    out = pl.pallas_call(
        kernel,
        out_shape=jax.ShapeDtypeStruct((Mp, D), out_dtype),
        grid_spec=pltpu.PrefetchScalarGridSpec(
            num_scalar_prefetch=0,
            grid=grid,
            in_specs=[
                pl.BlockSpec((bm, D), lambda m, f: (m, 0)),  # x rows (resident over f)
                pl.BlockSpec((D, bf), lambda m, f: (0, f)),  # W1 column slice
                pl.BlockSpec((1, bf), lambda m, f: (0, f)),  # b1 slice
                pl.BlockSpec((bf, D), lambda m, f: (f, 0)),  # W2 row slice
                pl.BlockSpec((1, D), lambda m, f: (0, 0)),   # b2 (grid-invariant)
            ],
            out_specs=pl.BlockSpec((bm, D), lambda m, f: (m, 0)),
            scratch_shapes=scratch,
        ),
        compiler_params=pltpu.CompilerParams(
            dimension_semantics=("parallel", "arbitrary"),
            vmem_limit_bytes=vmem_limit,
        ),
        cost_estimate=cost,
    )(x2d, w1, b1, w2, b2)

    if pad_m:
        out = out[:M]
    return out.reshape(orig_leading + (D,))


# -----------------------------------------------------------------------------
# Demo / self-check.
# -----------------------------------------------------------------------------
if __name__ == "__main__":
    # Lane-dense shapes: D and F multiples of 128, B*S = 128 rows.
    B, S, d_model, d_ff = 2, 64, 128, 256

    key = jax.random.PRNGKey(0)
    kx, k1, k2, kb1, kb2 = jax.random.split(key, 5)

    x = jax.random.normal(kx, (B, S, d_model), jnp.float32)
    w1 = jax.random.normal(k1, (d_model, d_ff), jnp.float32) / math.sqrt(d_model)
    b1 = jax.random.normal(kb1, (d_ff,), jnp.float32) * 0.02
    w2 = jax.random.normal(k2, (d_ff, d_model), jnp.float32) / math.sqrt(d_ff)
    b2 = jax.random.normal(kb2, (d_model,), jnp.float32) * 0.02

    # --- f32 input path (direct output accumulation, bf16 MXU compute) -------
    out = feed_forward_pallas(x, w1, b1, w2, b2)
    out = jax.block_until_ready(out)
    assert out.shape == (B, S, d_model)
    assert out.dtype == x.dtype

    ref = jnp.maximum(x @ w1 + b1, 0.0) @ w2 + b2
    np.testing.assert_allclose(np.asarray(out), np.asarray(ref),
                               rtol=5e-2, atol=5e-2)

    # --- bf16 input path (f32 scratch accumulator, bf16 writeback) -----------
    out_bf = feed_forward_pallas(x.astype(jnp.bfloat16), w1, b1, w2, b2)
    out_bf = jax.block_until_ready(out_bf)
    assert out_bf.dtype == jnp.bfloat16
    np.testing.assert_allclose(np.asarray(out_bf, dtype=np.float32),
                               np.asarray(ref), rtol=1e-1, atol=1e-1)

    print("KERNEL_OK")
</pallas_src>

<mosaic_0001>
module attributes {stable_mosaic.version = 11 : i64} {
  func.func @_ffn_kernel_direct(%arg0: i32, %arg1: i32, %arg2: memref<128x128xbf16, #tpu.memory_space<vmem>>, %arg3: memref<128x256xbf16, #tpu.memory_space<vmem>>, %arg4: memref<1x256xf32, #tpu.memory_space<vmem>>, %arg5: memref<256x128xbf16, #tpu.memory_space<vmem>>, %arg6: memref<1x128xf32, #tpu.memory_space<vmem>>, %arg7: memref<128x128xf32, #tpu.memory_space<vmem>>) attributes {dimension_semantics = [#tpu.dimension_semantics<parallel>, #tpu.dimension_semantics<arbitrary>], iteration_bounds = array<i64: 1, 1>, scalar_prefetch = 0 : i64, scratch_operands = 0 : i64, tpu.core_type = #tpu.core_type<tc>, window_params = [{transform_indices = @transform_0, window_bounds = array<i64: 128, 128>}, {transform_indices = @transform_1, window_bounds = array<i64: 128, 256>}, {transform_indices = @transform_2, window_bounds = array<i64: 1, 256>}, {transform_indices = @transform_3, window_bounds = array<i64: 256, 128>}, {pipeline_mode = #tpu.pipeline_mode<synchronous>, transform_indices = @transform_4, window_bounds = array<i64: 1, 128>}, {transform_indices = @transform_5, window_bounds = array<i64: 128, 128>}]} {
    %c0_i32 = arith.constant 0 : i32
    %0 = arith.cmpi eq, %arg1, %c0_i32 : i32
    %1 = arith.extui %0 : i1 to i32
    %c0_i32_0 = arith.constant 0 : i32
    %2 = arith.cmpi ne, %1, %c0_i32_0 : i32
    scf.if %2 {
      %cst_16 = arith.constant 0.000000e+00 : f32
      %20 = vector.broadcast %cst_16 : f32 to vector<128x128xf32>
      %c0_17 = arith.constant 0 : index
      %c0_18 = arith.constant 0 : index
      %21 = vector.load %arg7[%c0_17, %c0_18] : memref<128x128xf32, #tpu.memory_space<vmem>>, vector<128x128xf32>
      tpu.vector_store %arg7[%c0_17, %c0_18], %20 {strides = array<i32>} : memref<128x128xf32, #tpu.memory_space<vmem>>, vector<128x128xf32>,
    } else {
    }
    %c0 = arith.constant 0 : index
    %c0_1 = arith.constant 0 : index
    %3 = vector.load %arg2[%c0, %c0_1] : memref<128x128xbf16, #tpu.memory_space<vmem>>, vector<128x128xbf16>
    %c0_2 = arith.constant 0 : index
    %c0_3 = arith.constant 0 : index
    %4 = vector.load %arg3[%c0_2, %c0_3] : memref<128x256xbf16, #tpu.memory_space<vmem>>, vector<128x256xbf16>
    %cst = arith.constant dense<0.000000e+00> : vector<128x256xf32>
    %5 = tpu.matmul %3, %4, %cst {dimension_numbers = #tpu.dot_dimension_numbers<[1], [0], [0], [1], [0, 0, 1, 1], [], []>} : vector<128x128xbf16>, vector<128x256xbf16>, vector<128x256xf32> -> vector<128x256xf32>
    %c0_4 = arith.constant 0 : index
    %c0_5 = arith.constant 0 : index
    %6 = vector.load %arg4[%c0_4, %c0_5] : memref<1x256xf32, #tpu.memory_space<vmem>>, vector<1x256xf32>
    %7 = vector.broadcast %6 : vector<1x256xf32> to vector<128x256xf32>
    %8 = arith.addf %5, %7 : vector<128x256xf32>
    %cst_6 = arith.constant 0.000000e+00 : f32
    %9 = vector.broadcast %cst_6 : f32 to vector<128x256xf32>
    %10 = arith.maximumf %8, %9 : vector<128x256xf32>
    %c0_7 = arith.constant 0 : index
    %c0_8 = arith.constant 0 : index
    %11 = vector.load %arg7[%c0_7, %c0_8] : memref<128x128xf32, #tpu.memory_space<vmem>>, vector<128x128xf32>
    %12 = arith.truncf %10 : vector<128x256xf32> to vector<128x256xbf16>
    %c0_9 = arith.constant 0 : index
    %c0_10 = arith.constant 0 : index
    %13 = vector.load %arg5[%c0_9, %c0_10] : memref<256x128xbf16, #tpu.memory_space<vmem>>, vector<256x128xbf16>
    %cst_11 = arith.constant dense<0.000000e+00> : vector<128x128xf32>
    %14 = tpu.matmul %12, %13, %cst_11 {dimension_numbers = #tpu.dot_dimension_numbers<[1], [0], [0], [1], [0, 0, 1, 1], [], []>} : vector<128x256xbf16>, vector<256x128xbf16>, vector<128x128xf32> -> vector<128x128xf32>
    %15 = arith.addf %11, %14 : vector<128x128xf32>
    %c0_12 = arith.constant 0 : index
    %c0_13 = arith.constant 0 : index
    %16 = vector.load %arg7[%c0_12, %c0_13] : memref<128x128xf32, #tpu.memory_space<vmem>>, vector<128x128xf32>
    tpu.vector_store %arg7[%c0_12, %c0_13], %15 {strides = array<i32>} : memref<128x128xf32, #tpu.memory_space<vmem>>, vector<128x128xf32>,
    %c0_i32_14 = arith.constant 0 : i32
    %17 = arith.cmpi eq, %arg1, %c0_i32_14 : i32
    %18 = arith.extui %17 : i1 to i32
    %c0_i32_15 = arith.constant 0 : i32
    %19 = arith.cmpi ne, %18, %c0_i32_15 : i32
    scf.if %19 {
      %c0_16 = arith.constant 0 : index
      %c0_17 = arith.constant 0 : index
      %20 = vector.load %arg7[%c0_16, %c0_17] : memref<128x128xf32, #tpu.memory_space<vmem>>, vector<128x128xf32>
      %c0_18 = arith.constant 0 : index
      %c0_19 = arith.constant 0 : index
      %21 = vector.load %arg6[%c0_18, %c0_19] : memref<1x128xf32, #tpu.memory_space<vmem>>, vector<1x128xf32>
      %22 = vector.broadcast %21 : vector<1x128xf32> to vector<128x128xf32>
      %23 = arith.addf %20, %22 : vector<128x128xf32>
      %c0_20 = arith.constant 0 : index
      %c0_21 = arith.constant 0 : index
      %24 = vector.load %arg7[%c0_20, %c0_21] : memref<128x128xf32, #tpu.memory_space<vmem>>, vector<128x128xf32>
      tpu.vector_store %arg7[%c0_20, %c0_21], %23 {strides = array<i32>} : memref<128x128xf32, #tpu.memory_space<vmem>>, vector<128x128xf32>,
    } else {
    }
    return
  }
  func.func @transform_0(%arg0: i32, %arg1: i32) -> (i32, i32) {
    %c0_i32 = arith.constant 0 : i32
    %c0_i32_0 = arith.constant 0 : i32
    return %arg0, %c0_i32 : i32, i32
  }
  func.func @transform_1(%arg0: i32, %arg1: i32) -> (i32, i32) {
    %c0_i32 = arith.constant 0 : i32
    %c0_i32_0 = arith.constant 0 : i32
    return %c0_i32, %arg1 : i32, i32
  }
  func.func @transform_2(%arg0: i32, %arg1: i32) -> (i32, i32) {
    %c0_i32 = arith.constant 0 : i32
    %c0_i32_0 = arith.constant 0 : i32
    return %c0_i32, %arg1 : i32, i32
  }
  func.func @transform_3(%arg0: i32, %arg1: i32) -> (i32, i32) {
    %c0_i32 = arith.constant 0 : i32
    %c0_i32_0 = arith.constant 0 : i32
    return %arg1, %c0_i32 : i32, i32
  }
  func.func @transform_4(%arg0: i32, %arg1: i32) -> (i32, i32) {
    %c0_i32 = arith.constant 0 : i32
    %c0_i32_0 = arith.constant 0 : i32
    %c0_i32_1 = arith.constant 0 : i32
    return %c0_i32, %c0_i32_0 : i32, i32
  }
  func.func @transform_5(%arg0: i32, %arg1: i32) -> (i32, i32) {
    %c0_i32 = arith.constant 0 : i32
    %c0_i32_0 = arith.constant 0 : i32
    return %arg0, %c0_i32 : i32, i32
  }
}

</mosaic_0001>

<llo_original>
// kernel: tpu_custom_call.1
$region0: #{tpu_custom_call.1}
  #allocation0 [shape = 'u32[]', space=smem, size = 0x4, offset = 0x4, fixed_abs, tag = 'smem constant byte address 0x4 - core index']
  #allocation1 [shape = 'u32[72,128]{1,0:T(1,128)}', space=vmem, size = 0x9000, scoped, tag = 'internal scratch']
  %s0 = inlined_call_operand.hbm [shape: bf16[128,128], index: 0, kind: input, shape index: {}]
  %s1 = inlined_call_operand.hbm [shape: bf16[128,256], index: 1, kind: input, shape index: {}]
  %s2 = inlined_call_operand.hbm [shape: f32[1,256], index: 2, kind: input, shape index: {}]
  %s3 = inlined_call_operand.hbm [shape: bf16[256,128], index: 3, kind: input, shape index: {}]
  %s4 = inlined_call_operand.vmem [shape: f32[1,128], index: 4, kind: input, shape index: {}]
  %s5 = inlined_call_operand.hbm [shape: f32[128,128], index: 5, kind: output, shape index: {}]
  %s6 = sld [smem:[#allocation0]]
  $region54: #{tpu_custom_call.1} parent=0
    _
  %s8 = ssub.s32 1, %s6
  %s9 = scalar_select 0, %s8, %s6
  $region1: #{tpu_custom_call.1} parent=0
    #allocation2 [shape = 'u8[32768]{0}', space=vmem, size = 0x8000, scoped, tag = 'input window, operand 0, single buffered']
    #allocation3 [shape = 's32[1]{0}', space=sflag, size = 0x4, scoped, tag = 'scoped memory for tpu_custom_call.1']
    #allocation4 [shape = 's32[1]{0}', space=sflag, size = 0x4, scoped, tag = 'scoped memory for tpu_custom_call.1']
    #allocation5 [shape = 'u8[65536]{0}', space=vmem, size = 0x10000, scoped, tag = 'input window, operand 1, single buffered']
    #allocation6 [shape = 's32[1]{0}', space=sflag, size = 0x4, scoped, tag = 'scoped memory for tpu_custom_call.1']
    #allocation7 [shape = 'u8[1024]{0}', space=vmem, size = 0x400, scoped, tag = 'input window, operand 2, single buffered']
    #allocation8 [shape = 'u8[65536]{0}', space=vmem, size = 0x10000, scoped, tag = 'input window, operand 3, single buffered']
    #allocation9 [shape = 's32[1]{0}', space=sflag, size = 0x4, scoped, tag = 'scoped memory for tpu_custom_call.1']
    #allocation10 [shape = 'u8[65536]{0}', space=vmem, size = 0x10000, scoped, tag = 'output window, operand 0, single buffered']
    %10 = vsyncpa [#allocation3], 0
    %11 = vsyncpa [#allocation6], 0
    %12 = vsyncpa [#allocation9], 0
    %13 = vsyncpa [#allocation4], 0
    // Predicated region
    $region2: #{tpu_custom_call.1} parent=1 // pred_check
      _
    $region3: #{tpu_custom_call.1} parent=1 // pred_check_branch
      %15 = sbr.rel (0) target = $region5
    $region4: #{tpu_custom_call.1} parent=1 // pred_region
      %17 = vsyncadd [#allocation3], 0
      %s18 = sshll.u32 %s0, 4
      %s19 = int_to_ptr.hbm [resolvable:$true] %s18
      %s20 = sshll.u32 [#allocation2], 4
      %s21 = int_to_ptr.vmem [resolvable:$true] %s20
      %26 = dma.hbm_to_vmem [thread:$0]  %s19, 1024, %s21, [#allocation3], 64, 64, 4
    $region5: #{tpu_custom_call.1} parent=1 // pred_fallthru
      _
    // Predicated region
    $region6: #{tpu_custom_call.1} parent=1 // pred_check
      _
    $region7: #{tpu_custom_call.1} parent=1 // pred_check_branch
      %28 = sbr.rel (0) target = $region9
    $region8: #{tpu_custom_call.1} parent=1 // pred_region
      %30 = vsyncadd [#allocation6], 0
      %s31 = sshll.u32 %s1, 4
      %s32 = int_to_ptr.hbm [resolvable:$true] %s31
      %s33 = sshll.u32 [#allocation5], 4
      %s34 = int_to_ptr.vmem [resolvable:$true] %s33
      %39 = dma.hbm_to_vmem [thread:$0]  %s32, 2048, %s34, [#allocation6], 128, 128, 8
    $region9: #{tpu_custom_call.1} parent=1 // pred_fallthru
      _
    // Predicated region
    $region10: #{tpu_custom_call.1} parent=1 // pred_check
      _
    $region11: #{tpu_custom_call.1} parent=1 // pred_check_branch
      %41 = sbr.rel (0) target = $region13
    $region12: #{tpu_custom_call.1} parent=1 // pred_region
      %43 = vsyncadd [#allocation6], 0
      %s45 = sshll.u32 %s2, 4
      %s46 = int_to_ptr.hbm [resolvable:$true] %s45
      %s47 = sshll.u32 [#allocation7], 4
      %s48 = int_to_ptr.vmem [resolvable:$true] %s47
      %50 = dma.hbm_to_vmem [thread:$0]  %s46, 32, %s48, [#allocation6]
    $region13: #{tpu_custom_call.1} parent=1 // pred_fallthru
      _
    // Predicated region
    $region14: #{tpu_custom_call.1} parent=1 // pred_check
      _
    $region15: #{tpu_custom_call.1} parent=1 // pred_check_branch
      %52 = sbr.rel (0) target = $region17
    $region16: #{tpu_custom_call.1} parent=1 // pred_region
      %54 = vsyncadd [#allocation9], 0
      %s55 = sshll.u32 %s3, 4
      %s56 = int_to_ptr.hbm [resolvable:$true] %s55
      %s57 = sshll.u32 [#allocation8], 4
      %s58 = int_to_ptr.vmem [resolvable:$true] %s57
      %63 = dma.hbm_to_vmem [thread:$0]  %s56, 2048, %s58, [#allocation9], 64, 64, 4
    $region17: #{tpu_custom_call.1} parent=1 // pred_fallthru
      _
    // Predicated region
    $region18: #{tpu_custom_call.1} parent=1 // pred_check
      _
    $region19: #{tpu_custom_call.1} parent=1 // pred_check_branch
      %65 = sbr.rel (0) target = $region21
    $region20: #{tpu_custom_call.1} parent=1 // pred_region
      _
    $region21: #{tpu_custom_call.1} parent=1 // pred_fallthru
      _
    // Predicated region
    $region22: #{tpu_custom_call.1} parent=1 // pred_check
      _
    $region23: #{tpu_custom_call.1} parent=1 // pred_check_branch
      %67 = sbr.rel (0) target = $region25
    $region24: #{tpu_custom_call.1} parent=1 // pred_region
      %69 = dma.done [#allocation3], 1024
    $region25: #{tpu_custom_call.1} parent=1 // pred_fallthru
      _
    // Predicated region
    $region26: #{tpu_custom_call.1} parent=1 // pred_check
      _
    $region27: #{tpu_custom_call.1} parent=1 // pred_check_branch
      %71 = sbr.rel (0) target = $region29
    $region28: #{tpu_custom_call.1} parent=1 // pred_region
      %73 = dma.done [#allocation6], 2048
    $region29: #{tpu_custom_call.1} parent=1 // pred_fallthru
      _
    // Predicated region
    $region30: #{tpu_custom_call.1} parent=1 // pred_check
      _
    $region31: #{tpu_custom_call.1} parent=1 // pred_check_branch
      %75 = sbr.rel (0) target = $region33
    $region32: #{tpu_custom_call.1} parent=1 // pred_region
      %77 = dma.done [#allocation6], 32
    $region33: #{tpu_custom_call.1} parent=1 // pred_fallthru
      _
    // Predicated region
    $region34: #{tpu_custom_call.1} parent=1 // pred_check
      _
    $region35: #{tpu_custom_call.1} parent=1 // pred_check_branch
      %79 = sbr.rel (0) target = $region37
    $region36: #{tpu_custom_call.1} parent=1 // pred_region
      %81 = dma.done [#allocation9], 2048
    $region37: #{tpu_custom_call.1} parent=1 // pred_fallthru
      _
    %p82 = scmp.eq.s32.totalorder 0, 0
    // Predicated region
    $region38: #{tpu_custom_call.1} parent=1 // pred_check
      %p83 = pneg %p82
    $region39: #{tpu_custom_call.1} parent=1 // pred_check_branch
      %85 = sbr.rel (%p83) target = $region41
    $region40: #{tpu_custom_call.1} parent=1 // pred_region
      %86 = vst [vmem:[#allocation10] sm:$0xff] 0.0
      %87 = vst [vmem:[#allocation10 + $0x8] sm:$0xff] 0.0
      %88 = vst [vmem:[#allocation10 + $0x10] sm:$0xff] 0.0
      %89 = vst [vmem:[#allocation10 + $0x18] sm:$0xff] 0.0
      %90 = vst [vmem:[#allocation10 + $0x20] sm:$0xff] 0.0
      %91 = vst [vmem:[#allocation10 + $0x28] sm:$0xff] 0.0
      %92 = vst [vmem:[#allocation10 + $0x30] sm:$0xff] 0.0
      %93 = vst [vmem:[#allocation10 + $0x38] sm:$0xff] 0.0
      %94 = vst [vmem:[#allocation10 + $0x40] sm:$0xff] 0.0
      %95 = vst [vmem:[#allocation10 + $0x48] sm:$0xff] 0.0
      %96 = vst [vmem:[#allocation10 + $0x50] sm:$0xff] 0.0
      %97 = vst [vmem:[#allocation10 + $0x58] sm:$0xff] 0.0
      %98 = vst [vmem:[#allocation10 + $0x60] sm:$0xff] 0.0
      %99 = vst [vmem:[#allocation10 + $0x68] sm:$0xff] 0.0
      %100 = vst [vmem:[#allocation10 + $0x70] sm:$0xff] 0.0
      %101 = vst [vmem:[#allocation10 + $0x78] sm:$0xff] 0.0
    $region41: #{tpu_custom_call.1} parent=1 // pred_fallthru
      _
    %v102 = vld [vmem:[#allocation2] sm:$0xf]
    %v103 = vld [vmem:[#allocation2 + $0x4] sm:$0xf]
    %v104 = vld [vmem:[#allocation2 + $0x8] sm:$0xf]
    %v105 = vld [vmem:[#allocation2 + $0xc] sm:$0xf]
    %v106 = vld [vmem:[#allocation2 + $0x10] sm:$0xf]
    %v107 = vld [vmem:[#allocation2 + $0x14] sm:$0xf]
    %v108 = vld [vmem:[#allocation2 + $0x18] sm:$0xf]
    %v109 = vld [vmem:[#allocation2 + $0x1c] sm:$0xf]
    %v110 = vld [vmem:[#allocation2 + $0x20] sm:$0xf]
    %v111 = vld [vmem:[#allocation2 + $0x24] sm:$0xf]
    %v112 = vld [vmem:[#allocation2 + $0x28] sm:$0xf]
    %v113 = vld [vmem:[#allocation2 + $0x2c] sm:$0xf]
    %v114 = vld [vmem:[#allocation2 + $0x30] sm:$0xf]
    %v115 = vld [vmem:[#allocation2 + $0x34] sm:$0xf]
    %v116 = vld [vmem:[#allocation2 + $0x38] sm:$0xf]
    %v117 = vld [vmem:[#allocation2 + $0x3c] sm:$0xf]
    %v118 = vld [vmem:[#allocation5] sm:$0xff]
    %v119 = vld [vmem:[#allocation5 + $0x8] sm:$0xff]
    %v120 = vld [vmem:[#allocation5 + $0x10] sm:$0xff]
    %v121 = vld [vmem:[#allocation5 + $0x18] sm:$0xff]
    %v122 = vld [vmem:[#allocation5 + $0x20] sm:$0xff]
    %v123 = vld [vmem:[#allocation5 + $0x28] sm:$0xff]
    %v124 = vld [vmem:[#allocation5 + $0x30] sm:$0xff]
    %v125 = vld [vmem:[#allocation5 + $0x38] sm:$0xff]
    %v126 = vld [vmem:[#allocation5 + $0x40] sm:$0xff]
    %v127 = vld [vmem:[#allocation5 + $0x48] sm:$0xff]
    %v128 = vld [vmem:[#allocation5 + $0x50] sm:$0xff]
    %v129 = vld [vmem:[#allocation5 + $0x58] sm:$0xff]
    %v130 = vld [vmem:[#allocation5 + $0x60] sm:$0xff]
    %v131 = vld [vmem:[#allocation5 + $0x68] sm:$0xff]
    %v132 = vld [vmem:[#allocation5 + $0x70] sm:$0xff]
    %v133 = vld [vmem:[#allocation5 + $0x78] sm:$0xff]
    %v134 = vld [vmem:[#allocation7] sm:$0x3]
    %v136 = vperm.slane %v134, 0
    %v137 = vperm.slane %v134, 1
    %v156 = vunpack.c.l.b16 %v102
    %v157 = vunpack.c.l.b16 %v103
    %v158 = vunpack.c.l.b16 %v104
    %v159 = vunpack.c.l.b16 %v105
    %v160 = vunpack.c.l.b16 %v106
    %v161 = vunpack.c.l.b16 %v107
    %v162 = vunpack.c.l.b16 %v108
    %v163 = vunpack.c.l.b16 %v109
    %v164 = vunpack.c.l.b16 %v110
    %v165 = vunpack.c.l.b16 %v111
    %v166 = vunpack.c.l.b16 %v112
    %v167 = vunpack.c.l.b16 %v113
    %v168 = vunpack.c.l.b16 %v114
    %v169 = vunpack.c.l.b16 %v115
    %v170 = vunpack.c.l.b16 %v116
    %v171 = vunpack.c.l.b16 %v117
    %v172 = vpack.c.b16 %v157, %v156
    %v173 = vpack.c.b16 %v159, %v158
    %v174 = vpack.c.b16 %v161, %v160
    %v175 = vpack.c.b16 %v163, %v162
    %v176 = vpack.c.b16 %v165, %v164
    %v177 = vpack.c.b16 %v167, %v166
    %v178 = vpack.c.b16 %v169, %v168
    %v179 = vpack.c.b16 %v171, %v170
    %v204 = vunpack.c.l.b16 %v118
    %v205 = vunpack.c.h.b16 %v118
    %v206 = vunpack.c.l.b16 %v119
    %v207 = vunpack.c.h.b16 %v119
    %v208 = vunpack.c.l.b16 %v120
    %v209 = vunpack.c.h.b16 %v120
    %v210 = vunpack.c.l.b16 %v121
    %v211 = vunpack.c.h.b16 %v121
    %v212 = vunpack.c.l.b16 %v122
    %v213 = vunpack.c.h.b16 %v122
    %v214 = vunpack.c.l.b16 %v123
    %v215 = vunpack.c.h.b16 %v123
    %v216 = vunpack.c.l.b16 %v124
    %v217 = vunpack.c.h.b16 %v124
    %v218 = vunpack.c.l.b16 %v125
    %v219 = vunpack.c.h.b16 %v125
    %v220 = vunpack.c.l.b16 %v126
    %v221 = vunpack.c.h.b16 %v126
    %v222 = vunpack.c.l.b16 %v127
    %v223 = vunpack.c.h.b16 %v127
    %v224 = vunpack.c.l.b16 %v128
    %v225 = vunpack.c.h.b16 %v128
    %v226 = vunpack.c.l.b16 %v129
    %v227 = vunpack.c.h.b16 %v129
    %v228 = vunpack.c.l.b16 %v130
    %v229 = vunpack.c.h.b16 %v130
    %v230 = vunpack.c.l.b16 %v131
    %v231 = vunpack.c.h.b16 %v131
    %v232 = vunpack.c.l.b16 %v132
    %v233 = vunpack.c.h.b16 %v132
    %v234 = vunpack.c.l.b16 %v133
    %v235 = vunpack.c.h.b16 %v133
    %v236 = vpack.c.b16 %v206, %v204
    %v237 = vpack.c.b16 %v207, %v205
    %v238 = vpack.c.b16 %v210, %v208
    %v239 = vpack.c.b16 %v211, %v209
    %v240 = vpack.c.b16 %v214, %v212
    %v241 = vpack.c.b16 %v215, %v213
    %v242 = vpack.c.b16 %v218, %v216
    %v243 = vpack.c.b16 %v219, %v217
    %v244 = vpack.c.b16 %v222, %v220
    %v245 = vpack.c.b16 %v223, %v221
    %v246 = vpack.c.b16 %v226, %v224
    %v247 = vpack.c.b16 %v227, %v225
    %v248 = vpack.c.b16 %v230, %v228
    %v249 = vpack.c.b16 %v231, %v229
    %v250 = vpack.c.b16 %v234, %v232
    %v251 = vpack.c.b16 %v235, %v233
    %268 = vmatpush.bf16.msra.mxu0 %v250
    %269 = vmatpush.bf16.msra.mxu0 %v248
    %270 = vmatpush.bf16.msra.mxu0 %v246
    %271 = vmatpush.bf16.msra.mxu0 %v244
    %272 = vmatpush.bf16.msra.mxu0 %v242
    %273 = vmatpush.bf16.msra.mxu0 %v240
    %274 = vmatpush.bf16.msra.mxu0 %v238
    %275 = vmatpush.bf16.msra.mxu0 %v236
    %276 = vmatmul.bf16.gmra.mxu0 %v172
    %v277 = vpop.f32.mrf.mxu0
    %v278 = vadd.f32 %v136, %v277
    %v279 = vpop.f32.mrf.mxu0
    %v280 = vadd.f32 %v136, %v279
    %281 = vmatmul.bf16.gmra.mxu0 %v173
    %v282 = vpop.f32.mrf.mxu0
    %v283 = vadd.f32 %v136, %v282
    %v284 = vpop.f32.mrf.mxu0
    %v285 = vadd.f32 %v136, %v284
    %286 = vmatmul.bf16.gmra.mxu0 %v174
    %v287 = vpop.f32.mrf.mxu0
    %v288 = vadd.f32 %v136, %v287
    %v289 = vpop.f32.mrf.mxu0
    %v290 = vadd.f32 %v136, %v289
    %291 = vmatmul.bf16.gmra.mxu0 %v175
    %v292 = vpop.f32.mrf.mxu0
    %v293 = vadd.f32 %v136, %v292
    %v294 = vpop.f32.mrf.mxu0
    %v295 = vadd.f32 %v136, %v294
    %296 = vmatmul.bf16.gmra.mxu0 %v176
    %v297 = vpop.f32.mrf.mxu0
    %v298 = vadd.f32 %v136, %v297
    %v299 = vpop.f32.mrf.mxu0
    %v300 = vadd.f32 %v136, %v299
    %301 = vmatmul.bf16.gmra.mxu0 %v177
    %v302 = vpop.f32.mrf.mxu0
    %v303 = vadd.f32 %v136, %v302
    %v304 = vpop.f32.mrf.mxu0
    %v305 = vadd.f32 %v136, %v304
    %306 = vmatmul.bf16.gmra.mxu0 %v178
    %v307 = vpop.f32.mrf.mxu0
    %v308 = vadd.f32 %v136, %v307
    %v309 = vpop.f32.mrf.mxu0
    %v310 = vadd.f32 %v136, %v309
    %311 = vmatmul.bf16.gmra.mxu0 %v179
    %v312 = vpop.f32.mrf.mxu0
    %v313 = vadd.f32 %v136, %v312
    %v314 = vpop.f32.mrf.mxu0
    %v315 = vadd.f32 %v136, %v314
    %316 = vdwg.mxu0
    %317 = vmatpush.bf16.msra.mxu0 %v251
    %318 = vmatpush.bf16.msra.mxu0 %v249
    %319 = vmatpush.bf16.msra.mxu0 %v247
    %320 = vmatpush.bf16.msra.mxu0 %v245
    %321 = vmatpush.bf16.msra.mxu0 %v243
    %322 = vmatpush.bf16.msra.mxu0 %v241
    %323 = vmatpush.bf16.msra.mxu0 %v239
    %324 = vmatpush.bf16.msra.mxu0 %v237
    %325 = vmatmul.bf16.gmra.mxu0 %v172
    %v326 = vpop.f32.mrf.mxu0
    %v327 = vadd.f32 %v137, %v326
    %v328 = vpop.f32.mrf.mxu0
    %v329 = vadd.f32 %v137, %v328
    %330 = vmatmul.bf16.gmra.mxu0 %v173
    %v331 = vpop.f32.mrf.mxu0
    %v332 = vadd.f32 %v137, %v331
    %v333 = vpop.f32.mrf.mxu0
    %v334 = vadd.f32 %v137, %v333
    %335 = vmatmul.bf16.gmra.mxu0 %v174
    %v336 = vpop.f32.mrf.mxu0
    %v337 = vadd.f32 %v137, %v336
    %v338 = vpop.f32.mrf.mxu0
    %v339 = vadd.f32 %v137, %v338
    %340 = vmatmul.bf16.gmra.mxu0 %v175
    %v341 = vpop.f32.mrf.mxu0
    %v342 = vadd.f32 %v137, %v341
    %v343 = vpop.f32.mrf.mxu0
    %v344 = vadd.f32 %v137, %v343
    %345 = vmatmul.bf16.gmra.mxu0 %v176
    %v346 = vpop.f32.mrf.mxu0
    %v347 = vadd.f32 %v137, %v346
    %v348 = vpop.f32.mrf.mxu0
    %v349 = vadd.f32 %v137, %v348
    %350 = vmatmul.bf16.gmra.mxu0 %v177
    %v351 = vpop.f32.mrf.mxu0
    %v352 = vadd.f32 %v137, %v351
    %v353 = vpop.f32.mrf.mxu0
    %v354 = vadd.f32 %v137, %v353
    %355 = vmatmul.bf16.gmra.mxu0 %v178
    %v356 = vpop.f32.mrf.mxu0
    %v357 = vadd.f32 %v137, %v356
    %v358 = vpop.f32.mrf.mxu0
    %v359 = vadd.f32 %v137, %v358
    %360 = vmatmul.bf16.gmra.mxu0 %v179
    %v361 = vpop.f32.mrf.mxu0
    %v362 = vadd.f32 %v137, %v361
    %v363 = vpop.f32.mrf.mxu0
    %v364 = vadd.f32 %v137, %v363
    %365 = vdwg.mxu0
    %v366 = vmax.f32 %v278, 0.0
    %v367 = vmax.f32 %v327, 0.0
    %v368 = vmax.f32 %v280, 0.0
    %v369 = vmax.f32 %v329, 0.0
    %v370 = vmax.f32 %v283, 0.0
    %v371 = vmax.f32 %v332, 0.0
    %v372 = vmax.f32 %v285, 0.0
    %v373 = vmax.f32 %v334, 0.0
    %v374 = vmax.f32 %v288, 0.0
    %v375 = vmax.f32 %v337, 0.0
    %v376 = vmax.f32 %v290, 0.0
    %v377 = vmax.f32 %v339, 0.0
    %v378 = vmax.f32 %v293, 0.0
    %v379 = vmax.f32 %v342, 0.0
    %v380 = vmax.f32 %v295, 0.0
    %v381 = vmax.f32 %v344, 0.0
    %v382 = vmax.f32 %v298, 0.0
    %v383 = vmax.f32 %v347, 0.0
    %v384 = vmax.f32 %v300, 0.0
    %v385 = vmax.f32 %v349, 0.0
    %v386 = vmax.f32 %v303, 0.0
    %v387 = vmax.f32 %v352, 0.0
    %v388 = vmax.f32 %v305, 0.0
    %v389 = vmax.f32 %v354, 0.0
    %v390 = vmax.f32 %v308, 0.0
    %v391 = vmax.f32 %v357, 0.0
    %v392 = vmax.f32 %v310, 0.0
    %v393 = vmax.f32 %v359, 0.0
    %v394 = vmax.f32 %v313, 0.0
    %v395 = vmax.f32 %v362, 0.0
    %v396 = vmax.f32 %v315, 0.0
    %v397 = vmax.f32 %v364, 0.0
    %v398 = vld [vmem:[#allocation10] sm:$0xff]
    %v399 = vld [vmem:[#allocation10 + $0x8] sm:$0xff]
    %v400 = vld [vmem:[#allocation10 + $0x10] sm:$0xff]
    %v401 = vld [vmem:[#allocation10 + $0x18] sm:$0xff]
    %v402 = vld [vmem:[#allocation10 + $0x20] sm:$0xff]
    %v403 = vld [vmem:[#allocation10 + $0x28] sm:$0xff]
    %v404 = vld [vmem:[#allocation10 + $0x30] sm:$0xff]
    %v405 = vld [vmem:[#allocation10 + $0x38] sm:$0xff]
    %v406 = vld [vmem:[#allocation10 + $0x40] sm:$0xff]
    %v407 = vld [vmem:[#allocation10 + $0x48] sm:$0xff]
    %v408 = vld [vmem:[#allocation10 + $0x50] sm:$0xff]
    %v409 = vld [vmem:[#allocation10 + $0x58] sm:$0xff]
    %v410 = vld [vmem:[#allocation10 + $0x60] sm:$0xff]
    %v411 = vld [vmem:[#allocation10 + $0x68] sm:$0xff]
    %v412 = vld [vmem:[#allocation10 + $0x70] sm:$0xff]
    %v413 = vld [vmem:[#allocation10 + $0x78] sm:$0xff]
    %v414 = vpack.c.bf16 %v368, %v366
    %v415 = vpack.c.bf16 %v369, %v367
    %v416 = vpack.c.bf16 %v372, %v370
    %v417 = vpack.c.bf16 %v373, %v371
    %v418 = vpack.c.bf16 %v376, %v374
    %v419 = vpack.c.bf16 %v377, %v375
    %v420 = vpack.c.bf16 %v380, %v378
    %v421 = vpack.c.bf16 %v381, %v379
    %v422 = vpack.c.bf16 %v384, %v382
    %v423 = vpack.c.bf16 %v385, %v383
    %v424 = vpack.c.bf16 %v388, %v386
    %v425 = vpack.c.bf16 %v389, %v387
    %v426 = vpack.c.bf16 %v392, %v390
    %v427 = vpack.c.bf16 %v393, %v391
    %v428 = vpack.c.bf16 %v396, %v394
    %v429 = vpack.c.bf16 %v397, %v395
    %v430 = vld [vmem:[#allocation8] sm:$0xf]
    %v431 = vld [vmem:[#allocation8 + $0x4] sm:$0xf]
    %v432 = vld [vmem:[#allocation8 + $0x8] sm:$0xf]
    %v433 = vld [vmem:[#allocation8 + $0xc] sm:$0xf]
    %v434 = vld [vmem:[#allocation8 + $0x10] sm:$0xf]
    %v435 = vld [vmem:[#allocation8 + $0x14] sm:$0xf]
    %v436 = vld [vmem:[#allocation8 + $0x18] sm:$0xf]
    %v437 = vld [vmem:[#allocation8 + $0x1c] sm:$0xf]
    %v438 = vld [vmem:[#allocation8 + $0x20] sm:$0xf]
    %v439 = vld [vmem:[#allocation8 + $0x24] sm:$0xf]
    %v440 = vld [vmem:[#allocation8 + $0x28] sm:$0xf]
    %v441 = vld [vmem:[#allocation8 + $0x2c] sm:$0xf]
    %v442 = vld [vmem:[#allocation8 + $0x30] sm:$0xf]
    %v443 = vld [vmem:[#allocation8 + $0x34] sm:$0xf]
    %v444 = vld [vmem:[#allocation8 + $0x38] sm:$0xf]
    %v445 = vld [vmem:[#allocation8 + $0x3c] sm:$0xf]
    %v446 = vld [vmem:[#allocation8 + $0x40] sm:$0xf]
    %v447 = vld [vmem:[#allocation8 + $0x44] sm:$0xf]
    %v448 = vld [vmem:[#allocation8 + $0x48] sm:$0xf]
    %v449 = vld [vmem:[#allocation8 + $0x4c] sm:$0xf]
    %v450 = vld [vmem:[#allocation8 + $0x50] sm:$0xf]
    %v451 = vld [vmem:[#allocation8 + $0x54] sm:$0xf]
    %v452 = vld [vmem:[#allocation8 + $0x58] sm:$0xf]
    %v453 = vld [vmem:[#allocation8 + $0x5c] sm:$0xf]
    %v454 = vld [vmem:[#allocation8 + $0x60] sm:$0xf]
    %v455 = vld [vmem:[#allocation8 + $0x64] sm:$0xf]
    %v456 = vld [vmem:[#allocation8 + $0x68] sm:$0xf]
    %v457 = vld [vmem:[#allocation8 + $0x6c] sm:$0xf]
    %v458 = vld [vmem:[#allocation8 + $0x70] sm:$0xf]
    %v459 = vld [vmem:[#allocation8 + $0x74] sm:$0xf]
    %v460 = vld [vmem:[#allocation8 + $0x78] sm:$0xf]
    %v461 = vld [vmem:[#allocation8 + $0x7c] sm:$0xf]
    %v494 = vunpack.c.l.b16 %v430
    %v495 = vunpack.c.l.b16 %v431
    %v496 = vunpack.c.l.b16 %v432
    %v497 = vunpack.c.l.b16 %v433
    %v498 = vunpack.c.l.b16 %v434
    %v499 = vunpack.c.l.b16 %v435
    %v500 = vunpack.c.l.b16 %v436
    %v501 = vunpack.c.l.b16 %v437
    %v502 = vunpack.c.l.b16 %v438
    %v503 = vunpack.c.l.b16 %v439
    %v504 = vunpack.c.l.b16 %v440
    %v505 = vunpack.c.l.b16 %v441
    %v506 = vunpack.c.l.b16 %v442
    %v507 = vunpack.c.l.b16 %v443
    %v508 = vunpack.c.l.b16 %v444
    %v509 = vunpack.c.l.b16 %v445
    %v510 = vunpack.c.l.b16 %v446
    %v511 = vunpack.c.l.b16 %v447
    %v512 = vunpack.c.l.b16 %v448
    %v513 = vunpack.c.l.b16 %v449
    %v514 = vunpack.c.l.b16 %v450
    %v515 = vunpack.c.l.b16 %v451
    %v516 = vunpack.c.l.b16 %v452
    %v517 = vunpack.c.l.b16 %v453
    %v518 = vunpack.c.l.b16 %v454
    %v519 = vunpack.c.l.b16 %v455
    %v520 = vunpack.c.l.b16 %v456
    %v521 = vunpack.c.l.b16 %v457
    %v522 = vunpack.c.l.b16 %v458
    %v523 = vunpack.c.l.b16 %v459
    %v524 = vunpack.c.l.b16 %v460
    %v525 = vunpack.c.l.b16 %v461
    %v526 = vpack.c.b16 %v495, %v494
    %v527 = vpack.c.b16 %v497, %v496
    %v528 = vpack.c.b16 %v499, %v498
    %v529 = vpack.c.b16 %v501, %v500
    %v530 = vpack.c.b16 %v503, %v502
    %v531 = vpack.c.b16 %v505, %v504
    %v532 = vpack.c.b16 %v507, %v506
    %v533 = vpack.c.b16 %v509, %v508
    %v534 = vpack.c.b16 %v511, %v510
    %v535 = vpack.c.b16 %v513, %v512
    %v536 = vpack.c.b16 %v515, %v514
    %v537 = vpack.c.b16 %v517, %v516
    %v538 = vpack.c.b16 %v519, %v518
    %v539 = vpack.c.b16 %v521, %v520
    %v540 = vpack.c.b16 %v523, %v522
    %v541 = vpack.c.b16 %v525, %v524
    %558 = vmatpush.bf16.msra.mxu0 %v533
    %559 = vmatpush.bf16.msra.mxu0 %v532
    %560 = vmatpush.bf16.msra.mxu0 %v531
    %561 = vmatpush.bf16.msra.mxu0 %v530
    %562 = vmatpush.bf16.msra.mxu0 %v529
    %563 = vmatpush.bf16.msra.mxu0 %v528
    %564 = vmatpush.bf16.msra.mxu0 %v527
    %565 = vmatpush.bf16.msra.mxu0 %v526
    %566 = vmatmul.bf16.gmra.mxu0 %v414
    %v567 = vpop.f32.mrf.mxu0
    %v568 = vadd.f32 0.0, %v567
    %v569 = vpop.f32.mrf.mxu0
    %v570 = vadd.f32 0.0, %v569
    %571 = vmatmul.bf16.gmra.mxu0 %v416
    %v572 = vpop.f32.mrf.mxu0
    %v573 = vadd.f32 0.0, %v572
    %v574 = vpop.f32.mrf.mxu0
    %v575 = vadd.f32 0.0, %v574
    %576 = vmatmul.bf16.gmra.mxu0 %v418
    %v577 = vpop.f32.mrf.mxu0
    %v578 = vadd.f32 0.0, %v577
    %v579 = vpop.f32.mrf.mxu0
    %v580 = vadd.f32 0.0, %v579
    %581 = vmatmul.bf16.gmra.mxu0 %v420
    %v582 = vpop.f32.mrf.mxu0
    %v583 = vadd.f32 0.0, %v582
    %v584 = vpop.f32.mrf.mxu0
    %v585 = vadd.f32 0.0, %v584
    %586 = vmatmul.bf16.gmra.mxu0 %v422
    %v587 = vpop.f32.mrf.mxu0
    %v588 = vadd.f32 0.0, %v587
    %v589 = vpop.f32.mrf.mxu0
    %v590 = vadd.f32 0.0, %v589
    %591 = vmatmul.bf16.gmra.mxu0 %v424
    %v592 = vpop.f32.mrf.mxu0
    %v593 = vadd.f32 0.0, %v592
    %v594 = vpop.f32.mrf.mxu0
    %v595 = vadd.f32 0.0, %v594
    %596 = vmatmul.bf16.gmra.mxu0 %v426
    %v597 = vpop.f32.mrf.mxu0
    %v598 = vadd.f32 0.0, %v597
    %v599 = vpop.f32.mrf.mxu0
    %v600 = vadd.f32 0.0, %v599
    %601 = vmatmul.bf16.gmra.mxu0 %v428
    %v602 = vpop.f32.mrf.mxu0
    %v603 = vadd.f32 0.0, %v602
    %v604 = vpop.f32.mrf.mxu0
    %v605 = vadd.f32 0.0, %v604
    %606 = vdwg.mxu0
    %607 = vmatpush.bf16.msra.mxu0 %v541
    %608 = vmatpush.bf16.msra.mxu0 %v540
    %609 = vmatpush.bf16.msra.mxu0 %v539
    %610 = vmatpush.bf16.msra.mxu0 %v538
    %611 = vmatpush.bf16.msra.mxu0 %v537
    %612 = vmatpush.bf16.msra.mxu0 %v536
    %613 = vmatpush.bf16.msra.mxu0 %v535
    %614 = vmatpush.bf16.msra.mxu0 %v534
    %615 = vmatmul.bf16.gmra.mxu0 %v415
    %v616 = vpop.f32.mrf.mxu0
    %v617 = vadd.f32 %v568, %v616
    %v618 = vpop.f32.mrf.mxu0
    %v619 = vadd.f32 %v570, %v618
    %620 = vmatmul.bf16.gmra.mxu0 %v417
    %v621 = vpop.f32.mrf.mxu0
    %v622 = vadd.f32 %v573, %v621
    %v623 = vpop.f32.mrf.mxu0
    %v624 = vadd.f32 %v575, %v623
    %625 = vmatmul.bf16.gmra.mxu0 %v419
    %v626 = vpop.f32.mrf.mxu0
    %v627 = vadd.f32 %v578, %v626
    %v628 = vpop.f32.mrf.mxu0
    %v629 = vadd.f32 %v580, %v628
    %630 = vmatmul.bf16.gmra.mxu0 %v421
    %v631 = vpop.f32.mrf.mxu0
    %v632 = vadd.f32 %v583, %v631
    %v633 = vpop.f32.mrf.mxu0
    %v634 = vadd.f32 %v585, %v633
    %635 = vmatmul.bf16.gmra.mxu0 %v423
    %v636 = vpop.f32.mrf.mxu0
    %v637 = vadd.f32 %v588, %v636
    %v638 = vpop.f32.mrf.mxu0
    %v639 = vadd.f32 %v590, %v638
    %640 = vmatmul.bf16.gmra.mxu0 %v425
    %v641 = vpop.f32.mrf.mxu0
    %v642 = vadd.f32 %v593, %v641
    %v643 = vpop.f32.mrf.mxu0
    %v644 = vadd.f32 %v595, %v643
    %645 = vmatmul.bf16.gmra.mxu0 %v427
    %v646 = vpop.f32.mrf.mxu0
    %v647 = vadd.f32 %v598, %v646
    %v648 = vpop.f32.mrf.mxu0
    %v649 = vadd.f32 %v600, %v648
    %650 = vmatmul.bf16.gmra.mxu0 %v429
    %v651 = vpop.f32.mrf.mxu0
    %v652 = vadd.f32 %v603, %v651
    %v653 = vpop.f32.mrf.mxu0
    %v654 = vadd.f32 %v605, %v653
    %655 = vdwg.mxu0
    %v656 = vadd.f32 %v398, %v617
    %v657 = vadd.f32 %v399, %v619
    %v658 = vadd.f32 %v400, %v622
    %v659 = vadd.f32 %v401, %v624
    %v660 = vadd.f32 %v402, %v627
    %v661 = vadd.f32 %v403, %v629
    %v662 = vadd.f32 %v404, %v632
    %v663 = vadd.f32 %v405, %v634
    %v664 = vadd.f32 %v406, %v637
    %v665 = vadd.f32 %v407, %v639
    %v666 = vadd.f32 %v408, %v642
    %v667 = vadd.f32 %v409, %v644
    %v668 = vadd.f32 %v410, %v647
    %v669 = vadd.f32 %v411, %v649
    %v670 = vadd.f32 %v412, %v652
    %v671 = vadd.f32 %v413, %v654
    %672 = vst [vmem:[#allocation10] sm:$0xff] %v656
    %673 = vst [vmem:[#allocation10 + $0x8] sm:$0xff] %v657
    %674 = vst [vmem:[#allocation10 + $0x10] sm:$0xff] %v658
    %675 = vst [vmem:[#allocation10 + $0x18] sm:$0xff] %v659
    %676 = vst [vmem:[#allocation10 + $0x20] sm:$0xff] %v660
    %677 = vst [vmem:[#allocation10 + $0x28] sm:$0xff] %v661
    %678 = vst [vmem:[#allocation10 + $0x30] sm:$0xff] %v662
    %679 = vst [vmem:[#allocation10 + $0x38] sm:$0xff] %v663
    %680 = vst [vmem:[#allocation10 + $0x40] sm:$0xff] %v664
    %681 = vst [vmem:[#allocation10 + $0x48] sm:$0xff] %v665
    %682 = vst [vmem:[#allocation10 + $0x50] sm:$0xff] %v666
    %683 = vst [vmem:[#allocation10 + $0x58] sm:$0xff] %v667
    %684 = vst [vmem:[#allocation10 + $0x60] sm:$0xff] %v668
    %685 = vst [vmem:[#allocation10 + $0x68] sm:$0xff] %v669
    %686 = vst [vmem:[#allocation10 + $0x70] sm:$0xff] %v670
    %687 = vst [vmem:[#allocation10 + $0x78] sm:$0xff] %v671
    // Predicated region
    $region42: #{tpu_custom_call.1} parent=1 // pred_check
      %p688 = pneg %p82
    $region43: #{tpu_custom_call.1} parent=1 // pred_check_branch
      %690 = sbr.rel (%p688) target = $region45
    $region44: #{tpu_custom_call.1} parent=1 // pred_region
      %v691 = vld [vmem:[#allocation10] sm:$0xff]
      %v692 = vld [vmem:[#allocation10 + $0x8] sm:$0xff]
      %v693 = vld [vmem:[#allocation10 + $0x10] sm:$0xff]
      %v694 = vld [vmem:[#allocation10 + $0x18] sm:$0xff]
      %v695 = vld [vmem:[#allocation10 + $0x20] sm:$0xff]
      %v696 = vld [vmem:[#allocation10 + $0x28] sm:$0xff]
      %v697 = vld [vmem:[#allocation10 + $0x30] sm:$0xff]
      %v698 = vld [vmem:[#allocation10 + $0x38] sm:$0xff]
      %v699 = vld [vmem:[#allocation10 + $0x40] sm:$0xff]
      %v700 = vld [vmem:[#allocation10 + $0x48] sm:$0xff]
      %v701 = vld [vmem:[#allocation10 + $0x50] sm:$0xff]
      %v702 = vld [vmem:[#allocation10 + $0x58] sm:$0xff]
      %v703 = vld [vmem:[#allocation10 + $0x60] sm:$0xff]
      %v704 = vld [vmem:[#allocation10 + $0x68] sm:$0xff]
      %v705 = vld [vmem:[#allocation10 + $0x70] sm:$0xff]
      %v706 = vld [vmem:[#allocation10 + $0x78] sm:$0xff]
      %v707 = vld [vmem:[%s4] sm:$0x1]
      %v709 = vperm.slane %v707, 0
      %v711 = vadd.f32 %v691, %v709
      %v712 = vadd.f32 %v692, %v709
      %v713 = vadd.f32 %v693, %v709
      %v714 = vadd.f32 %v694, %v709
      %v715 = vadd.f32 %v695, %v709
      %v716 = vadd.f32 %v696, %v709
      %v717 = vadd.f32 %v697, %v709
      %v718 = vadd.f32 %v698, %v709
      %v719 = vadd.f32 %v699, %v709
      %v720 = vadd.f32 %v700, %v709
      %v721 = vadd.f32 %v701, %v709
      %v722 = vadd.f32 %v702, %v709
      %v723 = vadd.f32 %v703, %v709
      %v724 = vadd.f32 %v704, %v709
      %v725 = vadd.f32 %v705, %v709
      %v726 = vadd.f32 %v706, %v709
      %727 = vst [vmem:[#allocation10] sm:$0xff] %v711
      %728 = vst [vmem:[#allocation10 + $0x8] sm:$0xff] %v712
      %729 = vst [vmem:[#allocation10 + $0x10] sm:$0xff] %v713
      %730 = vst [vmem:[#allocation10 + $0x18] sm:$0xff] %v714
      %731 = vst [vmem:[#allocation10 + $0x20] sm:$0xff] %v715
      %732 = vst [vmem:[#allocation10 + $0x28] sm:$0xff] %v716
      %733 = vst [vmem:[#allocation10 + $0x30] sm:$0xff] %v717
      %734 = vst [vmem:[#allocation10 + $0x38] sm:$0xff] %v718
      %735 = vst [vmem:[#allocation10 + $0x40] sm:$0xff] %v719
      %736 = vst [vmem:[#allocation10 + $0x48] sm:$0xff] %v720
      %737 = vst [vmem:[#allocation10 + $0x50] sm:$0xff] %v721
      %738 = vst [vmem:[#allocation10 + $0x58] sm:$0xff] %v722
      %739 = vst [vmem:[#allocation10 + $0x60] sm:$0xff] %v723
      %740 = vst [vmem:[#allocation10 + $0x68] sm:$0xff] %v724
      %741 = vst [vmem:[#allocation10 + $0x70] sm:$0xff] %v725
      %742 = vst [vmem:[#allocation10 + $0x78] sm:$0xff] %v726
    $region45: #{tpu_custom_call.1} parent=1 // pred_fallthru
      _
    // Predicated region
    $region46: #{tpu_custom_call.1} parent=1 // pred_check
      _
    $region47: #{tpu_custom_call.1} parent=1 // pred_check_branch
      %744 = sbr.rel (0) target = $region49
    $region48: #{tpu_custom_call.1} parent=1 // pred_region
      %746 = vsyncadd [#allocation4], 0
      %s747 = sshll.u32 [#allocation10], 4
      %s748 = int_to_ptr.vmem [resolvable:$true] %s747
      %s749 = sshll.u32 %s5, 4
      %s750 = int_to_ptr.hbm [resolvable:$true] %s749
      %755 = dma.vmem_to_hbm [thread:$0]  %s748, 2048, %s750, [#allocation4], 128, 128, 8
    $region49: #{tpu_custom_call.1} parent=1 // pred_fallthru
      _
    // Predicated region
    $region50: #{tpu_custom_call.1} parent=1 // pred_check
      _
    $region51: #{tpu_custom_call.1} parent=1 // pred_check_branch
      %757 = sbr.rel (0) target = $region53
    $region52: #{tpu_custom_call.1} parent=1 // pred_region
      %759 = dma.done [#allocation4], 2048
    $region53: #{tpu_custom_call.1} parent=1 // pred_fallthru
      _
    %760 = vsyncpa [#allocation3], 1
    %761 = vsyncpa [#allocation6], 1
    %762 = vsyncpa [#allocation9], 1
    %763 = vsyncpa [#allocation4], 1

</llo_original>
